<compile_context>
chip_gen: v7x
topology: tpu7x:2x2x1
jax: 0.10.0
libtpu: 0.0.40
codegen_flags: <defaults>
</compile_context>

<pallas_src>
import functools

import jax
import jax.numpy as jnp
from jax import lax
from jax.experimental import pallas as pl
from jax.experimental.pallas import tpu as pltpu

OUT_W = 128        # lane-dense output slab width (lane 0 = q1, lane 1 = q2, 2.. = x3)
L2_FUSE_MAX = 256  # fuse layer-2 block-diagonally only while k*H fits one MXU tile


# --------------------------------------------------------------------------- #
# Kernel
# --------------------------------------------------------------------------- #
def _qnet_kernel(*refs, has_action, normalize_first4, fuse_l2):
    o_ref = refs[-1]
    it = iter(refs[:-1])
    state_ref = next(it)
    action_ref = next(it) if has_action else None
    w1s_ref = next(it)
    w1a_ref = next(it) if has_action else None
    b1_ref = next(it)
    w2_ref = next(it)
    b2_ref = next(it)
    w3_ref = next(it)
    b3_ref = next(it)

    cdt = w1s_ref.dtype  # MXU compute dtype (bf16); accumulation stays f32.

    # ---- layer 1: all towers side by side; concat eliminated by the weight split.
    h = jnp.dot(state_ref[...].astype(cdt), w1s_ref[...],
                preferred_element_type=jnp.float32)
    if has_action:
        h = h + jnp.dot(action_ref[...].astype(cdt), w1a_ref[...],
                        preferred_element_type=jnp.float32)
    h = jnp.maximum(h + b1_ref[...], 0.0).astype(cdt)

    # ---- layer 2
    if fuse_l2:
        # small H: one block-diagonal (kH, kH) matmul — a single MXU tile.
        g = jnp.dot(h, w2_ref[...], preferred_element_type=jnp.float32)
    else:
        # large H: per-tower (H, H) dots avoid the 2-3x block-diagonal waste.
        k, H, _ = w2_ref.shape
        g = jnp.concatenate(
            [jnp.dot(h[:, t * H:(t + 1) * H], w2_ref[t],
                     preferred_element_type=jnp.float32) for t in range(k)],
            axis=-1)
    g = jnp.maximum(g + b2_ref[...], 0.0).astype(cdt)

    # ---- layer 3: (kH, OUT_W) lane slab -> q1 lane 0, q2 lane 1, x3 lanes 2..
    y = jnp.dot(g, w3_ref[...], preferred_element_type=jnp.float32) + b3_ref[...]

    if normalize_first4:
        # F.normalize(x3[:, :4], p=2, dim=-1, eps=1e-12) on lanes 2..5 via a
        # lane mask (VPU) + rsqrt (EUP) — no lane slicing/concat in-kernel.
        lane = lax.broadcasted_iota(jnp.int32, y.shape, 1)
        mask = (lane >= 2) & (lane < 6)
        sq = jnp.where(mask, y * y, 0.0)
        s = jnp.sum(sq, axis=-1, keepdims=True)
        inv = lax.rsqrt(jnp.maximum(s, 1e-24))  # == 1 / max(sqrt(s), 1e-12)
        y = jnp.where(mask, y * inv, y)

    o_ref[...] = y


# --------------------------------------------------------------------------- #
# Parameter init (torch-layout masters) + fusion into the kernel layout
# --------------------------------------------------------------------------- #
def xavier_uniform(key, fan_in, fan_out):
    # torch.nn.init.xavier_uniform_(gain=1) on an (out, in) weight; stored
    # transposed as (in, out) so the kernel computes x @ W + b.
    a = (6.0 / (fan_in + fan_out)) ** 0.5
    return jax.random.uniform(key, (fan_in, fan_out), jnp.float32, -a, a)


def init_master_params(key, num_inputs, num_actions, hidden_dim, extra_pred_dim):
    """Un-fused, PyTorch-equivalent weights. All biases are 0 (constant_(bias, 0))."""
    in_dim = num_inputs + num_actions
    H = hidden_dim
    ks = jax.random.split(key, 9)
    m = {
        "w1": xavier_uniform(ks[0], in_dim, H),
        "w2": xavier_uniform(ks[1], H, H),
        "w3": xavier_uniform(ks[2], H, 1),
        "w4": xavier_uniform(ks[3], in_dim, H),
        "w5": xavier_uniform(ks[4], H, H),
        "w6": xavier_uniform(ks[5], H, 1),
    }
    if extra_pred_dim > 0:
        m["w7"] = xavier_uniform(ks[6], num_inputs, H)
        m["w8"] = xavier_uniform(ks[7], H, H)
        m["we"] = xavier_uniform(ks[8], H, extra_pred_dim)
    return m


def fuse_qnetwork_params(masters, num_inputs, num_actions, hidden_dim,
                         extra_pred_dim, param_dtype=jnp.bfloat16):
    """Fuse all towers into the 3-matmul kernel layout (bf16 weights, f32 biases)."""
    assert 2 + extra_pred_dim <= OUT_W, "output slab too narrow for extra head"
    H = hidden_dim
    has_extra = extra_pred_dim > 0
    k = 3 if has_extra else 2

    # layer 1: towers side by side; the extra tower only sees `state` (its
    # action block stays zero), which removes the torch.cat([state, action]).
    w1s = jnp.zeros((num_inputs, k * H), jnp.float32)
    w1s = w1s.at[:, 0:H].set(masters["w1"][:num_inputs])
    w1s = w1s.at[:, H:2 * H].set(masters["w4"][:num_inputs])
    w1a = jnp.zeros((max(num_actions, 1), k * H), jnp.float32)
    if num_actions > 0:
        w1a = w1a.at[:, 0:H].set(masters["w1"][num_inputs:])
        w1a = w1a.at[:, H:2 * H].set(masters["w4"][num_inputs:])

    # layer 3: every tower lands in one OUT_W-wide lane slab -> one unmasked store.
    w3f = jnp.zeros((k * H, OUT_W), jnp.float32)
    w3f = w3f.at[0:H, 0].set(masters["w3"][:, 0])
    w3f = w3f.at[H:2 * H, 1].set(masters["w6"][:, 0])

    l2_blocks = [masters["w2"], masters["w5"]]
    if has_extra:
        w1s = w1s.at[:, 2 * H:3 * H].set(masters["w7"])
        l2_blocks.append(masters["w8"])
        w3f = w3f.at[2 * H:3 * H, 2:2 + extra_pred_dim].set(masters["we"])

    if k * H <= L2_FUSE_MAX:
        # small H: block-diagonal (kH, kH) — a single MXU tile, zero waste.
        w2f = jnp.zeros((k * H, k * H), jnp.float32)
        for t, blk in enumerate(l2_blocks):
            w2f = w2f.at[t * H:(t + 1) * H, t * H:(t + 1) * H].set(blk)
    else:
        # large H: keep per-tower (H, H) blocks -> per-tower dots in the kernel.
        w2f = jnp.stack(l2_blocks, axis=0)

    params = {
        "w1s": w1s.astype(param_dtype),
        "b1": jnp.zeros((1, k * H), jnp.float32),   # torch bias init = 0
        "w2": w2f.astype(param_dtype),
        "b2": jnp.zeros((1, k * H), jnp.float32),
        "w3": w3f.astype(param_dtype),
        "b3": jnp.zeros((1, OUT_W), jnp.float32),
    }
    if num_actions > 0:
        params["w1a"] = w1a.astype(param_dtype)
    return params


# --------------------------------------------------------------------------- #
# Forward wrapper
# --------------------------------------------------------------------------- #
def qnetwork_forward(params, state, action=None, extra_pred_dim=0, block_b=128):
    """Mirrors QNetwork.forward: returns (x1, x2, x3)."""
    batch = state.shape[0]
    has_action = action is not None
    has_extra = extra_pred_dim > 0
    normalize_first4 = has_extra and (extra_pred_dim == 7)
    fuse_l2 = params["w2"].ndim == 2

    # Batch tiling: single program at tiny batch; otherwise split so the grid has
    # >= 2 programs (v7x has 2 TensorCores) while staying sublane (8) aligned.
    if batch <= 8:
        bb = batch
    else:
        half = pl.cdiv(batch, 2)
        bb = min(block_b, max(8, pl.cdiv(half, 8) * 8), batch)
    grid = (pl.cdiv(batch, bb),)

    def batch_spec(arr):
        return pl.BlockSpec((bb, arr.shape[1]), lambda i: (i, 0))

    def rep_spec(arr):
        nd = arr.ndim
        return pl.BlockSpec(arr.shape, lambda i, _nd=nd: (0,) * _nd)

    inputs, in_specs = [state], [batch_spec(state)]
    if has_action:
        inputs.append(action)
        in_specs.append(batch_spec(action))
    weight_order = (["w1s"] + (["w1a"] if has_action else [])
                    + ["b1", "w2", "b2", "w3", "b3"])
    # Weights are grid-invariant (constant index_map) so Pallas never re-DMAs them
    # across grid steps; default double-buffering only duplicates their VMEM copy.
    for name in weight_order:
        inputs.append(params[name])
        in_specs.append(rep_spec(params[name]))

    # Explicit VMEM budget: >= 32 MiB (raises v5e's 16 MiB scoped default),
    # <= 64 MiB (v7x physical per-core VMEM). Blocks are double-buffered.
    weight_bytes = sum(int(params[n].size) * jnp.dtype(params[n].dtype).itemsize
                       for n in weight_order)
    act_bytes = bb * state.shape[1] * 4
    if has_action:
        act_bytes += bb * action.shape[1] * 4
    act_bytes += bb * OUT_W * 4
    vmem_limit = int(min(max(2 * (weight_bytes + act_bytes) + (8 << 20), 32 << 20),
                         64 << 20))

    # Advisory cost estimate so XLA doesn't schedule around the call conservatively.
    kH = params["b1"].shape[1]
    in_dim = state.shape[1] + (action.shape[1] if has_action else 0)
    l2_macs = kH * kH if fuse_l2 else (params["w2"].shape[0]
                                       * params["w2"].shape[1] ** 2)
    flops = 2 * batch * (in_dim * kH + l2_macs + kH * OUT_W)
    bytes_acc = (sum(int(a.size) * jnp.dtype(a.dtype).itemsize for a in inputs)
                 + batch * OUT_W * 4)
    cost = pl.CostEstimate(flops=flops,
                           transcendentals=batch if normalize_first4 else 0,
                           bytes_accessed=bytes_acc)

    kernel = functools.partial(_qnet_kernel, has_action=has_action,
                               normalize_first4=normalize_first4, fuse_l2=fuse_l2)

    out = pl.pallas_call(
        kernel,
        out_shape=jax.ShapeDtypeStruct((batch, OUT_W), jnp.float32),
        grid=grid,
        in_specs=in_specs,
        out_specs=pl.BlockSpec((bb, OUT_W), lambda i: (i, 0)),
        compiler_params=pltpu.CompilerParams(
            dimension_semantics=("parallel",),
            vmem_limit_bytes=vmem_limit),
        cost_estimate=cost,
    )(*inputs)

    x1 = out[:, 0:1]
    x2 = out[:, 1:2]
    x3 = out[:, 2:2 + extra_pred_dim] if has_extra else None
    return x1, x2, x3


# --------------------------------------------------------------------------- #
# Pure-JAX reference (PyTorch semantics, mirroring the kernel's bf16 MXU dtype)
# --------------------------------------------------------------------------- #
def reference_forward(m, state, action, extra_pred_dim):
    def bf(x):  # mirror bf16 matmul inputs with f32 accumulation
        return x.astype(jnp.bfloat16).astype(jnp.float32)

    def tower(x, wa, wb, wc):
        h = jnp.maximum(bf(x) @ bf(wa), 0.0)
        h = jnp.maximum(bf(h) @ bf(wb), 0.0)
        return bf(h) @ bf(wc)

    xu = jnp.concatenate([state, action], axis=1) if action is not None else state
    x1 = tower(xu, m["w1"], m["w2"], m["w3"])
    x2 = tower(xu, m["w4"], m["w5"], m["w6"])
    x3 = None
    if extra_pred_dim > 0:
        x3 = tower(state, m["w7"], m["w8"], m["we"])
        if extra_pred_dim == 7:
            head = x3[:, :4]
            nrm = jnp.sqrt(jnp.sum(head * head, axis=-1, keepdims=True))
            head = head / jnp.maximum(nrm, 1e-12)
            x3 = jnp.concatenate([head, x3[:, 4:]], axis=-1)
    return x1, x2, x3


# --------------------------------------------------------------------------- #
# Demo / sanity check
# --------------------------------------------------------------------------- #
if __name__ == "__main__":
    batch = 2
    num_inputs = 16
    num_actions = 4
    hidden_dim = 32
    extra_pred_dim = 7  # exercises the F.normalize branch

    root = jax.random.PRNGKey(0)
    k_params, k_state, k_action = jax.random.split(root, 3)

    masters = init_master_params(k_params, num_inputs, num_actions,
                                 hidden_dim, extra_pred_dim)
    params = fuse_qnetwork_params(masters, num_inputs, num_actions,
                                  hidden_dim, extra_pred_dim)

    state = jax.random.normal(k_state, (batch, num_inputs), jnp.float32)
    action = jax.random.normal(k_action, (batch, num_actions), jnp.float32)

    x1, x2, x3 = qnetwork_forward(params, state, action,
                                  extra_pred_dim=extra_pred_dim)
    jax.block_until_ready((x1, x2, x3))

    assert x1.shape == (batch, 1)
    assert x2.shape == (batch, 1)
    assert x3.shape == (batch, extra_pred_dim)

    x1r, x2r, x3r = reference_forward(masters, state, action, extra_pred_dim)
    assert jnp.allclose(x1, x1r, rtol=1e-2, atol=1e-2)
    assert jnp.allclose(x2, x2r, rtol=1e-2, atol=1e-2)
    assert jnp.allclose(x3, x3r, rtol=1e-2, atol=1e-2)

    print("KERNEL_OK")
</pallas_src>

<mosaic_0001>
module attributes {stable_mosaic.version = 11 : i64} {
  func.func @_qnet_kernel(%arg0: i32, %arg1: memref<2x16xf32, #tpu.memory_space<vmem>>, %arg2: memref<2x4xf32, #tpu.memory_space<vmem>>, %arg3: memref<16x96xbf16, #tpu.memory_space<vmem>>, %arg4: memref<4x96xbf16, #tpu.memory_space<vmem>>, %arg5: memref<1x96xf32, #tpu.memory_space<vmem>>, %arg6: memref<96x96xbf16, #tpu.memory_space<vmem>>, %arg7: memref<1x96xf32, #tpu.memory_space<vmem>>, %arg8: memref<96x128xbf16, #tpu.memory_space<vmem>>, %arg9: memref<1x128xf32, #tpu.memory_space<vmem>>, %arg10: memref<2x128xf32, #tpu.memory_space<vmem>>) attributes {dimension_semantics = [#tpu.dimension_semantics<parallel>], iteration_bounds = array<i64: 1>, scalar_prefetch = 0 : i64, scratch_operands = 0 : i64, tpu.core_type = #tpu.core_type<tc>, window_params = [{transform_indices = @transform_0, window_bounds = array<i64: 2, 16>}, {transform_indices = @transform_1, window_bounds = array<i64: 2, 4>}, {pipeline_mode = #tpu.pipeline_mode<synchronous>, transform_indices = @transform_2, window_bounds = array<i64: 16, 96>}, {pipeline_mode = #tpu.pipeline_mode<synchronous>, transform_indices = @transform_3, window_bounds = array<i64: 4, 96>}, {pipeline_mode = #tpu.pipeline_mode<synchronous>, transform_indices = @transform_4, window_bounds = array<i64: 1, 96>}, {pipeline_mode = #tpu.pipeline_mode<synchronous>, transform_indices = @transform_5, window_bounds = array<i64: 96, 96>}, {pipeline_mode = #tpu.pipeline_mode<synchronous>, transform_indices = @transform_6, window_bounds = array<i64: 1, 96>}, {pipeline_mode = #tpu.pipeline_mode<synchronous>, transform_indices = @transform_7, window_bounds = array<i64: 96, 128>}, {pipeline_mode = #tpu.pipeline_mode<synchronous>, transform_indices = @transform_8, window_bounds = array<i64: 1, 128>}, {transform_indices = @transform_9, window_bounds = array<i64: 2, 128>}]} {
    %c0 = arith.constant 0 : index
    %c0_0 = arith.constant 0 : index
    %0 = vector.load %arg1[%c0, %c0_0] : memref<2x16xf32, #tpu.memory_space<vmem>>, vector<2x16xf32>
    %1 = arith.truncf %0 : vector<2x16xf32> to vector<2x16xbf16>
    %c0_1 = arith.constant 0 : index
    %c0_2 = arith.constant 0 : index
    %2 = vector.load %arg3[%c0_1, %c0_2] : memref<16x96xbf16, #tpu.memory_space<vmem>>, vector<16x96xbf16>
    %cst = arith.constant dense<0.000000e+00> : vector<2x96xf32>
    %3 = tpu.matmul %1, %2, %cst {dimension_numbers = #tpu.dot_dimension_numbers<[1], [0], [0], [1], [0, 0, 1, 1], [], []>} : vector<2x16xbf16>, vector<16x96xbf16>, vector<2x96xf32> -> vector<2x96xf32>
    %c0_3 = arith.constant 0 : index
    %c0_4 = arith.constant 0 : index
    %4 = vector.load %arg2[%c0_3, %c0_4] : memref<2x4xf32, #tpu.memory_space<vmem>>, vector<2x4xf32>
    %5 = arith.truncf %4 : vector<2x4xf32> to vector<2x4xbf16>
    %c0_5 = arith.constant 0 : index
    %c0_6 = arith.constant 0 : index
    %6 = vector.load %arg4[%c0_5, %c0_6] : memref<4x96xbf16, #tpu.memory_space<vmem>>, vector<4x96xbf16>
    %cst_7 = arith.constant dense<0.000000e+00> : vector<2x96xf32>
    %7 = tpu.matmul %5, %6, %cst_7 {dimension_numbers = #tpu.dot_dimension_numbers<[1], [0], [0], [1], [0, 0, 1, 1], [], []>} : vector<2x4xbf16>, vector<4x96xbf16>, vector<2x96xf32> -> vector<2x96xf32>
    %8 = arith.addf %3, %7 : vector<2x96xf32>
    %c0_8 = arith.constant 0 : index
    %c0_9 = arith.constant 0 : index
    %9 = vector.load %arg5[%c0_8, %c0_9] : memref<1x96xf32, #tpu.memory_space<vmem>>, vector<1x96xf32>
    %10 = vector.broadcast %9 : vector<1x96xf32> to vector<2x96xf32>
    %11 = arith.addf %8, %10 : vector<2x96xf32>
    %cst_10 = arith.constant 0.000000e+00 : f32
    %12 = vector.broadcast %cst_10 : f32 to vector<2x96xf32>
    %13 = arith.maximumf %11, %12 : vector<2x96xf32>
    %14 = arith.truncf %13 : vector<2x96xf32> to vector<2x96xbf16>
    %c0_11 = arith.constant 0 : index
    %c0_12 = arith.constant 0 : index
    %15 = vector.load %arg6[%c0_11, %c0_12] : memref<96x96xbf16, #tpu.memory_space<vmem>>, vector<96x96xbf16>
    %cst_13 = arith.constant dense<0.000000e+00> : vector<2x96xf32>
    %16 = tpu.matmul %14, %15, %cst_13 {dimension_numbers = #tpu.dot_dimension_numbers<[1], [0], [0], [1], [0, 0, 1, 1], [], []>} : vector<2x96xbf16>, vector<96x96xbf16>, vector<2x96xf32> -> vector<2x96xf32>
    %c0_14 = arith.constant 0 : index
    %c0_15 = arith.constant 0 : index
    %17 = vector.load %arg7[%c0_14, %c0_15] : memref<1x96xf32, #tpu.memory_space<vmem>>, vector<1x96xf32>
    %18 = vector.broadcast %17 : vector<1x96xf32> to vector<2x96xf32>
    %19 = arith.addf %16, %18 : vector<2x96xf32>
    %cst_16 = arith.constant 0.000000e+00 : f32
    %20 = vector.broadcast %cst_16 : f32 to vector<2x96xf32>
    %21 = arith.maximumf %19, %20 : vector<2x96xf32>
    %22 = arith.truncf %21 : vector<2x96xf32> to vector<2x96xbf16>
    %c0_17 = arith.constant 0 : index
    %c0_18 = arith.constant 0 : index
    %23 = vector.load %arg8[%c0_17, %c0_18] : memref<96x128xbf16, #tpu.memory_space<vmem>>, vector<96x128xbf16>
    %cst_19 = arith.constant dense<0.000000e+00> : vector<2x128xf32>
    %24 = tpu.matmul %22, %23, %cst_19 {dimension_numbers = #tpu.dot_dimension_numbers<[1], [0], [0], [1], [0, 0, 1, 1], [], []>} : vector<2x96xbf16>, vector<96x128xbf16>, vector<2x128xf32> -> vector<2x128xf32>
    %c0_20 = arith.constant 0 : index
    %c0_21 = arith.constant 0 : index
    %25 = vector.load %arg9[%c0_20, %c0_21] : memref<1x128xf32, #tpu.memory_space<vmem>>, vector<1x128xf32>
    %26 = vector.broadcast %25 : vector<1x128xf32> to vector<2x128xf32>
    %27 = arith.addf %24, %26 : vector<2x128xf32>
    %28 = tpu.iota {dimensions = array<i32: 1>} : vector<2x128xi32>
    %c2_i32 = arith.constant 2 : i32
    %29 = vector.broadcast %c2_i32 : i32 to vector<2x128xi32>
    %30 = arith.cmpi sge, %28, %29 : vector<2x128xi32>
    %c6_i32 = arith.constant 6 : i32
    %31 = vector.broadcast %c6_i32 : i32 to vector<2x128xi32>
    %32 = arith.cmpi slt, %28, %31 : vector<2x128xi32>
    %33 = arith.andi %30, %32 : vector<2x128xi1>
    %34 = arith.mulf %27, %27 : vector<2x128xf32>
    %cst_22 = arith.constant 0.000000e+00 : f32
    %35 = vector.broadcast %cst_22 : f32 to vector<2x128xf32>
    %36 = arith.select %33, %34, %35 : vector<2x128xi1>, vector<2x128xf32>
    %cst_23 = arith.constant dense<0.000000e+00> : vector<2xf32>
    %37 = vector.multi_reduction <add>, %36, %cst_23 [1] : vector<2x128xf32> to vector<2xf32>
    %38 = vector.shape_cast %37 : vector<2xf32> to vector<2x1xf32>
    %cst_24 = arith.constant 1.000000e-24 : f32
    %39 = vector.broadcast %cst_24 : f32 to vector<2x1xf32>
    %40 = arith.maximumf %38, %39 : vector<2x1xf32>
    %41 = math.rsqrt %40 : vector<2x1xf32>
    %42 = vector.broadcast %41 : vector<2x1xf32> to vector<2x128xf32>
    %43 = arith.mulf %27, %42 : vector<2x128xf32>
    %44 = arith.select %33, %43, %27 : vector<2x128xi1>, vector<2x128xf32>
    %c0_25 = arith.constant 0 : index
    %c0_26 = arith.constant 0 : index
    %45 = vector.load %arg10[%c0_25, %c0_26] : memref<2x128xf32, #tpu.memory_space<vmem>>, vector<2x128xf32>
    tpu.vector_store %arg10[%c0_25, %c0_26], %44 {strides = array<i32>} : memref<2x128xf32, #tpu.memory_space<vmem>>, vector<2x128xf32>,
    return
  }
  func.func @transform_0(%arg0: i32) -> (i32, i32) {
    %c0_i32 = arith.constant 0 : i32
    %c0_i32_0 = arith.constant 0 : i32
    return %arg0, %c0_i32 : i32, i32
  }
  func.func @transform_1(%arg0: i32) -> (i32, i32) {
    %c0_i32 = arith.constant 0 : i32
    %c0_i32_0 = arith.constant 0 : i32
    return %arg0, %c0_i32 : i32, i32
  }
  func.func @transform_2(%arg0: i32) -> (i32, i32) {
    %c0_i32 = arith.constant 0 : i32
    %c0_i32_0 = arith.constant 0 : i32
    %c0_i32_1 = arith.constant 0 : i32
    return %c0_i32, %c0_i32_0 : i32, i32
  }
  func.func @transform_3(%arg0: i32) -> (i32, i32) {
    %c0_i32 = arith.constant 0 : i32
    %c0_i32_0 = arith.constant 0 : i32
    %c0_i32_1 = arith.constant 0 : i32
    return %c0_i32, %c0_i32_0 : i32, i32
  }
  func.func @transform_4(%arg0: i32) -> (i32, i32) {
    %c0_i32 = arith.constant 0 : i32
    %c0_i32_0 = arith.constant 0 : i32
    %c0_i32_1 = arith.constant 0 : i32
    return %c0_i32, %c0_i32_0 : i32, i32
  }
  func.func @transform_5(%arg0: i32) -> (i32, i32) {
    %c0_i32 = arith.constant 0 : i32
    %c0_i32_0 = arith.constant 0 : i32
    %c0_i32_1 = arith.constant 0 : i32
    return %c0_i32, %c0_i32_0 : i32, i32
  }
  func.func @transform_6(%arg0: i32) -> (i32, i32) {
    %c0_i32 = arith.constant 0 : i32
    %c0_i32_0 = arith.constant 0 : i32
    %c0_i32_1 = arith.constant 0 : i32
    return %c0_i32, %c0_i32_0 : i32, i32
  }
  func.func @transform_7(%arg0: i32) -> (i32, i32) {
    %c0_i32 = arith.constant 0 : i32
    %c0_i32_0 = arith.constant 0 : i32
    %c0_i32_1 = arith.constant 0 : i32
    return %c0_i32, %c0_i32_0 : i32, i32
  }
  func.func @transform_8(%arg0: i32) -> (i32, i32) {
    %c0_i32 = arith.constant 0 : i32
    %c0_i32_0 = arith.constant 0 : i32
    %c0_i32_1 = arith.constant 0 : i32
    return %c0_i32, %c0_i32_0 : i32, i32
  }
  func.func @transform_9(%arg0: i32) -> (i32, i32) {
    %c0_i32 = arith.constant 0 : i32
    %c0_i32_0 = arith.constant 0 : i32
    return %arg0, %c0_i32 : i32, i32
  }
}

</mosaic_0001>

<llo_original>
// kernel: tpu_custom_call.1
$region0: #{tpu_custom_call.1}
  #allocation0 [shape = 'u32[]', space=smem, size = 0x4, offset = 0x4, fixed_abs, tag = 'smem constant byte address 0x4 - core index']
  #allocation1 [shape = 'u32[144,128]{1,0:T(1,128)}', space=vmem, size = 0x12000, scoped, tag = 'internal scratch']
  %s0 = inlined_call_operand.hbm [shape: f32[2,16], index: 0, kind: input, shape index: {}]
  %s1 = inlined_call_operand.vmem [shape: f32[2,4], index: 1, kind: input, shape index: {}]
  %s2 = inlined_call_operand.hbm [shape: bf16[16,96], index: 2, kind: input, shape index: {}]
  %s3 = inlined_call_operand.vmem [shape: bf16[4,96], index: 3, kind: input, shape index: {}]
  %s4 = inlined_call_operand.vmem [shape: f32[1,96], index: 4, kind: input, shape index: {}]
  %s5 = inlined_call_operand.hbm [shape: bf16[96,96], index: 5, kind: input, shape index: {}]
  %s6 = inlined_call_operand.vmem [shape: f32[1,96], index: 6, kind: input, shape index: {}]
  %s7 = inlined_call_operand.hbm [shape: bf16[96,128], index: 7, kind: input, shape index: {}]
  %s8 = inlined_call_operand.vmem [shape: f32[1,128], index: 8, kind: input, shape index: {}]
  %s9 = inlined_call_operand.hbm [shape: f32[2,128], index: 9, kind: output, shape index: {}]
  %s10 = sld [smem:[#allocation0]]
  $region62: #{tpu_custom_call.1} parent=0
    _
  %s12 = ssub.s32 1, %s10
  %s13 = scalar_select 0, %s12, %s10
  $region1: #{tpu_custom_call.1} parent=0
    #allocation2 [shape = 'u8[1024]{0}', space=vmem, size = 0x400, scoped, tag = 'input window, operand 0, single buffered']
    #allocation3 [shape = 's32[1]{0}', space=sflag, size = 0x4, scoped, tag = 'scoped memory for tpu_custom_call.1']
    #allocation4 [shape = 's32[1]{0}', space=sflag, size = 0x4, scoped, tag = 'scoped memory for tpu_custom_call.1']
    #allocation5 [shape = 'u8[4096]{0}', space=vmem, size = 0x1000, scoped, tag = 'input window, operand 2, single buffered']
    #allocation6 [shape = 's32[1]{0}', space=sflag, size = 0x4, scoped, tag = 'scoped memory for tpu_custom_call.1']
    #allocation7 [shape = 'u8[24576]{0}', space=vmem, size = 0x6000, scoped, tag = 'input window, operand 5, single buffered']
    #allocation8 [shape = 'u8[24576]{0}', space=vmem, size = 0x6000, scoped, tag = 'input window, operand 7, single buffered']
    #allocation9 [shape = 's32[1]{0}', space=sflag, size = 0x4, scoped, tag = 'scoped memory for tpu_custom_call.1']
    #allocation10 [shape = 'u8[1024]{0}', space=vmem, size = 0x400, scoped, tag = 'output window, operand 0, single buffered']
    %14 = vsyncpa [#allocation3], 0
    %15 = vsyncpa [#allocation6], 0
    %16 = vsyncpa [#allocation9], 0
    %17 = vsyncpa [#allocation4], 0
    // Predicated region
    $region2: #{tpu_custom_call.1} parent=1 // pred_check
      _
    $region3: #{tpu_custom_call.1} parent=1 // pred_check_branch
      %19 = sbr.rel (0) target = $region5
    $region4: #{tpu_custom_call.1} parent=1 // pred_region
      %s21 = ssub.s32 32, 32
      %22 = vsyncadd [#allocation3], %s21
      %s24 = sshll.u32 [#allocation2], 4
      %s25 = int_to_ptr.vmem [resolvable:$true] %s24
      %27 = dma.hbm_to_vmem [thread:$0]  %s0, 32, %s25, [#allocation3]
    $region5: #{tpu_custom_call.1} parent=1 // pred_fallthru
      _
    // Predicated region
    $region6: #{tpu_custom_call.1} parent=1 // pred_check
      _
    $region7: #{tpu_custom_call.1} parent=1 // pred_check_branch
      %29 = sbr.rel (0) target = $region9
    $region8: #{tpu_custom_call.1} parent=1 // pred_region
      _
    $region9: #{tpu_custom_call.1} parent=1 // pred_fallthru
      _
    // Predicated region
    $region10: #{tpu_custom_call.1} parent=1 // pred_check
      _
    $region11: #{tpu_custom_call.1} parent=1 // pred_check_branch
      %31 = sbr.rel (0) target = $region13
    $region12: #{tpu_custom_call.1} parent=1 // pred_region
      %s33 = ssub.s32 128, 128
      %34 = vsyncadd [#allocation6], %s33
      %s35 = sshll.u32 [#allocation5], 4
      %s36 = int_to_ptr.vmem [resolvable:$true] %s35
      %41 = dma.hbm_to_vmem [thread:$0]  %s2, 128, %s36, [#allocation6], 64, 64, 4
    $region13: #{tpu_custom_call.1} parent=1 // pred_fallthru
      _
    // Predicated region
    $region14: #{tpu_custom_call.1} parent=1 // pred_check
      _
    $region15: #{tpu_custom_call.1} parent=1 // pred_check_branch
      %43 = sbr.rel (0) target = $region17
    $region16: #{tpu_custom_call.1} parent=1 // pred_region
      _
    $region17: #{tpu_custom_call.1} parent=1 // pred_fallthru
      _
    // Predicated region
    $region18: #{tpu_custom_call.1} parent=1 // pred_check
      _
    $region19: #{tpu_custom_call.1} parent=1 // pred_check_branch
      %45 = sbr.rel (0) target = $region21
    $region20: #{tpu_custom_call.1} parent=1 // pred_region
      _
    $region21: #{tpu_custom_call.1} parent=1 // pred_fallthru
      _
    // Predicated region
    $region22: #{tpu_custom_call.1} parent=1 // pred_check
      _
    $region23: #{tpu_custom_call.1} parent=1 // pred_check_branch
      %47 = sbr.rel (0) target = $region25
    $region24: #{tpu_custom_call.1} parent=1 // pred_region
      %s49 = ssub.s32 768, 768
      %50 = vsyncadd [#allocation6], %s49
      %s51 = sshll.u32 [#allocation7], 4
      %s52 = int_to_ptr.vmem [resolvable:$true] %s51
      %57 = dma.hbm_to_vmem [thread:$0]  %s5, 768, %s52, [#allocation6], 64, 64, 4
    $region25: #{tpu_custom_call.1} parent=1 // pred_fallthru
      _
    // Predicated region
    $region26: #{tpu_custom_call.1} parent=1 // pred_check
      _
    $region27: #{tpu_custom_call.1} parent=1 // pred_check_branch
      %59 = sbr.rel (0) target = $region29
    $region28: #{tpu_custom_call.1} parent=1 // pred_region
      _
    $region29: #{tpu_custom_call.1} parent=1 // pred_fallthru
      _
    // Predicated region
    $region30: #{tpu_custom_call.1} parent=1 // pred_check
      _
    $region31: #{tpu_custom_call.1} parent=1 // pred_check_branch
      %61 = sbr.rel (0) target = $region33
    $region32: #{tpu_custom_call.1} parent=1 // pred_region
      %s63 = ssub.s32 768, 768
      %64 = vsyncadd [#allocation9], %s63
      %s65 = sshll.u32 [#allocation8], 4
      %s66 = int_to_ptr.vmem [resolvable:$true] %s65
      %71 = dma.hbm_to_vmem [thread:$0]  %s7, 768, %s66, [#allocation9], 64, 64, 4
    $region33: #{tpu_custom_call.1} parent=1 // pred_fallthru
      _
    // Predicated region
    $region34: #{tpu_custom_call.1} parent=1 // pred_check
      _
    $region35: #{tpu_custom_call.1} parent=1 // pred_check_branch
      %73 = sbr.rel (0) target = $region37
    $region36: #{tpu_custom_call.1} parent=1 // pred_region
      _
    $region37: #{tpu_custom_call.1} parent=1 // pred_fallthru
      _
    // Predicated region
    $region38: #{tpu_custom_call.1} parent=1 // pred_check
      _
    $region39: #{tpu_custom_call.1} parent=1 // pred_check_branch
      %75 = sbr.rel (0) target = $region41
    $region40: #{tpu_custom_call.1} parent=1 // pred_region
      %76 = dma.done [#allocation3], 32
    $region41: #{tpu_custom_call.1} parent=1 // pred_fallthru
      _
    // Predicated region
    $region42: #{tpu_custom_call.1} parent=1 // pred_check
      _
    $region43: #{tpu_custom_call.1} parent=1 // pred_check_branch
      %78 = sbr.rel (0) target = $region45
    $region44: #{tpu_custom_call.1} parent=1 // pred_region
      %79 = dma.done [#allocation6], 128
    $region45: #{tpu_custom_call.1} parent=1 // pred_fallthru
      _
    // Predicated region
    $region46: #{tpu_custom_call.1} parent=1 // pred_check
      _
    $region47: #{tpu_custom_call.1} parent=1 // pred_check_branch
      %81 = sbr.rel (0) target = $region49
    $region48: #{tpu_custom_call.1} parent=1 // pred_region
      %82 = dma.done [#allocation6], 768
    $region49: #{tpu_custom_call.1} parent=1 // pred_fallthru
      _
    // Predicated region
    $region50: #{tpu_custom_call.1} parent=1 // pred_check
      _
    $region51: #{tpu_custom_call.1} parent=1 // pred_check_branch
      %84 = sbr.rel (0) target = $region53
    $region52: #{tpu_custom_call.1} parent=1 // pred_region
      %85 = dma.done [#allocation9], 768
    $region53: #{tpu_custom_call.1} parent=1 // pred_fallthru
      _
    %v87 = vld [vmem:[#allocation2] sm:$0x3]
    %v88 = vpack.c.bf16 %v87, %v87
    %v89 = vld [vmem:[#allocation5] sm:$0xf]
    %v90 = vld [vmem:[#allocation5 + $0x4] sm:$0xf]
    %v91 = vld [vmem:[%s1] sm:$0x3]
    %v92 = vpack.c.bf16 %v91, %v91
    %v93 = vld [vmem:[%s3] sm:$0x3]
    %vm94 = vcmask 31744
    %v96 = vsel %vm94, %v92, 0
    %vm98 = vcmask 1041408
    %v100 = vsel %vm98, %v93, 0
    %102 = vmatprep.subr.bf16.mxu0 0
    %103 = vmatpush1.bf16.msra.mxu0 %v100
    %104 = vmatprep.subr.bf16.mxu0 0
    %105 = vmatpush1.bf16.msra.mxu0 0
    %106 = vmatprep.subr.bf16.mxu0 0
    %107 = vmatpush1.bf16.msra.mxu0 0
    %108 = vmatprep.subr.bf16.mxu0 0
    %109 = vmatpush1.bf16.msra.mxu0 0
    %110 = vmatprep.subr.bf16.mxu0 0
    %111 = vmatpush1.bf16.msra.mxu0 0
    %112 = vmatprep.subr.bf16.mxu0 0
    %113 = vmatpush1.bf16.msra.mxu0 0
    %114 = vmatprep.subr.bf16.mxu0 0
    %115 = vmatpush1.bf16.msra.mxu0 0
    %116 = vmatprep.subr.bf16.mxu0 0
    %117 = vmatpush1.bf16.msra.mxu0 0
    %118 = vmatprep.subr.bf16.mxu0 0
    %119 = vmatpush1.bf16.msra.mxu0 0
    %120 = vmatprep.subr.bf16.mxu0 0
    %121 = vmatpush1.bf16.msra.mxu0 0
    %122 = vmatprep.subr.bf16.mxu0 0
    %123 = vmatpush1.bf16.msra.mxu0 0
    %124 = vmatprep.subr.bf16.mxu0 0
    %125 = vmatpush1.bf16.msra.mxu0 0
    %126 = vmatprep.subr.bf16.mxu0 0
    %127 = vmatpush1.bf16.msra.mxu0 0
    %128 = vmatprep.subr.bf16.mxu0 0
    %129 = vmatpush1.bf16.msra.mxu0 0
    %130 = vmatprep.subr.bf16.mxu0 0
    %131 = vmatpush1.bf16.msra.mxu0 0
    %132 = vmatprep.subr.bf16.mxu0 0
    %133 = vmatpush1.bf16.msra.mxu0 0
    %134 = vmatprep.mubr.bf16.mxu0 0
    %135 = vmatmul.mubr.bf16.gmra.mrb[0].mxu0 %v96
    %v136 = vpop.f32.mrb[0].mxu0
    %v137 = vadd.f32 0.0, %v136
    %v138 = vpop.f32.mrb[0].mxu0
    %v139 = vpop.f32.mrb[0].mxu0
    %v140 = vpop.f32.mrb[0].mxu0
    %141 = vdwg.mxu0
    %v144 = vunpack.c.l.b16 %v89
    %v145 = vunpack.c.l.b16 %v90
    %v146 = vpack.c.b16 %v145, %v144
    %vm148 = vcmask 130048
    %v150 = vsel %vm148, %v88, 0
    %152 = vmatprep.subr.bf16.mxu0 0
    %153 = vmatpush1.bf16.msra.mxu0 %v146
    %154 = vmatprep.subr.bf16.mxu0 0
    %155 = vmatpush1.bf16.msra.mxu0 0
    %156 = vmatprep.subr.bf16.mxu0 0
    %157 = vmatpush1.bf16.msra.mxu0 0
    %158 = vmatprep.subr.bf16.mxu0 0
    %159 = vmatpush1.bf16.msra.mxu0 0
    %160 = vmatprep.subr.bf16.mxu0 0
    %161 = vmatpush1.bf16.msra.mxu0 0
    %162 = vmatprep.subr.bf16.mxu0 0
    %163 = vmatpush1.bf16.msra.mxu0 0
    %164 = vmatprep.subr.bf16.mxu0 0
    %165 = vmatpush1.bf16.msra.mxu0 0
    %166 = vmatprep.subr.bf16.mxu0 0
    %167 = vmatpush1.bf16.msra.mxu0 0
    %168 = vmatprep.subr.bf16.mxu0 0
    %169 = vmatpush1.bf16.msra.mxu0 0
    %170 = vmatprep.subr.bf16.mxu0 0
    %171 = vmatpush1.bf16.msra.mxu0 0
    %172 = vmatprep.subr.bf16.mxu0 0
    %173 = vmatpush1.bf16.msra.mxu0 0
    %174 = vmatprep.subr.bf16.mxu0 0
    %175 = vmatpush1.bf16.msra.mxu0 0
    %176 = vmatprep.subr.bf16.mxu0 0
    %177 = vmatpush1.bf16.msra.mxu0 0
    %178 = vmatprep.subr.bf16.mxu0 0
    %179 = vmatpush1.bf16.msra.mxu0 0
    %180 = vmatprep.subr.bf16.mxu0 0
    %181 = vmatpush1.bf16.msra.mxu0 0
    %182 = vmatprep.subr.bf16.mxu0 0
    %183 = vmatpush1.bf16.msra.mxu0 0
    %184 = vmatprep.mubr.bf16.mxu0 0
    %185 = vmatmul.mubr.bf16.gmra.mrb[0].mxu0 %v150
    %v186 = vpop.f32.mrb[0].mxu0
    %v187 = vadd.f32 %v137, %v186
    %v188 = vpop.f32.mrb[0].mxu0
    %v189 = vpop.f32.mrb[0].mxu0
    %v190 = vpop.f32.mrb[0].mxu0
    %191 = vdwg.mxu0
    %v192 = vld [vmem:[%s4] sm:$0x1]
    %v194 = vlaneseq
    %v195 = vshrl.u32 %v194, 7
    %v196 = vsub.s32 0, %v195
    %v197 = vrot.slane %v192, %v196
    %v199 = vadd.f32 %v187, %v197
    %v200 = vmax.f32 %v199, 0.0
    %v201 = vpack.c.bf16 %v200, %v200
    %v202 = vld [vmem:[#allocation7] sm:$0xf]
    %v203 = vld [vmem:[#allocation7 + $0x4] sm:$0xf]
    %v204 = vld [vmem:[#allocation7 + $0x8] sm:$0xf]
    %v205 = vld [vmem:[#allocation7 + $0xc] sm:$0xf]
    %v206 = vld [vmem:[#allocation7 + $0x10] sm:$0xf]
    %v207 = vld [vmem:[#allocation7 + $0x14] sm:$0xf]
    %v208 = vld [vmem:[#allocation7 + $0x18] sm:$0xf]
    %v209 = vld [vmem:[#allocation7 + $0x1c] sm:$0xf]
    %v210 = vld [vmem:[#allocation7 + $0x20] sm:$0xf]
    %v211 = vld [vmem:[#allocation7 + $0x24] sm:$0xf]
    %v212 = vld [vmem:[#allocation7 + $0x28] sm:$0xf]
    %v213 = vld [vmem:[#allocation7 + $0x2c] sm:$0xf]
    %v214 = vld [vmem:[%s6] sm:$0x1]
    %v216 = vlaneseq
    %v217 = vshrl.u32 %v216, 7
    %v218 = vsub.s32 0, %v217
    %v219 = vrot.slane %v214, %v218
    %v233 = vunpack.c.l.b16 %v202
    %v234 = vunpack.c.l.b16 %v203
    %v235 = vunpack.c.l.b16 %v204
    %v236 = vunpack.c.l.b16 %v205
    %v237 = vunpack.c.l.b16 %v206
    %v238 = vunpack.c.l.b16 %v207
    %v239 = vunpack.c.l.b16 %v208
    %v240 = vunpack.c.l.b16 %v209
    %v241 = vunpack.c.l.b16 %v210
    %v242 = vunpack.c.l.b16 %v211
    %v243 = vunpack.c.l.b16 %v212
    %v244 = vunpack.c.l.b16 %v213
    %v245 = vpack.c.b16 %v234, %v233
    %v246 = vpack.c.b16 %v236, %v235
    %v247 = vpack.c.b16 %v238, %v237
    %v248 = vpack.c.b16 %v240, %v239
    %v249 = vpack.c.b16 %v242, %v241
    %v250 = vpack.c.b16 %v244, %v243
    %vm257 = vcmask 785408
    %v259 = vsel %vm257, %v201, 0
    %261 = vmatprep.subr.bf16.mxu0 0
    %262 = vmatpush1.bf16.msra.mxu0 %v245
    %263 = vmatprep.subr.bf16.mxu0 0
    %264 = vmatpush1.bf16.msra.mxu0 %v246
    %265 = vmatprep.subr.bf16.mxu0 0
    %266 = vmatpush1.bf16.msra.mxu0 %v247
    %267 = vmatprep.subr.bf16.mxu0 0
    %268 = vmatpush1.bf16.msra.mxu0 %v248
    %269 = vmatprep.subr.bf16.mxu0 0
    %270 = vmatpush1.bf16.msra.mxu0 %v249
    %271 = vmatprep.subr.bf16.mxu0 0
    %272 = vmatpush1.bf16.msra.mxu0 %v250
    %273 = vmatprep.subr.bf16.mxu0 0
    %274 = vmatpush1.bf16.msra.mxu0 0
    %275 = vmatprep.subr.bf16.mxu0 0
    %276 = vmatpush1.bf16.msra.mxu0 0
    %277 = vmatprep.subr.bf16.mxu0 0
    %278 = vmatpush1.bf16.msra.mxu0 0
    %279 = vmatprep.subr.bf16.mxu0 0
    %280 = vmatpush1.bf16.msra.mxu0 0
    %281 = vmatprep.subr.bf16.mxu0 0
    %282 = vmatpush1.bf16.msra.mxu0 0
    %283 = vmatprep.subr.bf16.mxu0 0
    %284 = vmatpush1.bf16.msra.mxu0 0
    %285 = vmatprep.subr.bf16.mxu0 0
    %286 = vmatpush1.bf16.msra.mxu0 0
    %287 = vmatprep.subr.bf16.mxu0 0
    %288 = vmatpush1.bf16.msra.mxu0 0
    %289 = vmatprep.subr.bf16.mxu0 0
    %290 = vmatpush1.bf16.msra.mxu0 0
    %291 = vmatprep.subr.bf16.mxu0 0
    %292 = vmatpush1.bf16.msra.mxu0 0
    %293 = vmatprep.mubr.bf16.mxu0 0
    %294 = vmatmul.mubr.bf16.gmra.mrb[0].mxu0 %v259
    %v295 = vpop.f32.mrb[0].mxu0
    %v296 = vadd.f32 %v219, %v295
    %v297 = vpop.f32.mrb[0].mxu0
    %v298 = vpop.f32.mrb[0].mxu0
    %v299 = vpop.f32.mrb[0].mxu0
    %300 = vdwg.mxu0
    %v301 = vmax.f32 %v296, 0.0
    %v302 = vpack.c.bf16 %v301, %v301
    %v303 = vld [vmem:[#allocation8] sm:$0xf]
    %v304 = vld [vmem:[#allocation8 + $0x4] sm:$0xf]
    %v305 = vld [vmem:[#allocation8 + $0x8] sm:$0xf]
    %v306 = vld [vmem:[#allocation8 + $0xc] sm:$0xf]
    %v307 = vld [vmem:[#allocation8 + $0x10] sm:$0xf]
    %v308 = vld [vmem:[#allocation8 + $0x14] sm:$0xf]
    %v309 = vld [vmem:[#allocation8 + $0x18] sm:$0xf]
    %v310 = vld [vmem:[#allocation8 + $0x1c] sm:$0xf]
    %v311 = vld [vmem:[#allocation8 + $0x20] sm:$0xf]
    %v312 = vld [vmem:[#allocation8 + $0x24] sm:$0xf]
    %v313 = vld [vmem:[#allocation8 + $0x28] sm:$0xf]
    %v314 = vld [vmem:[#allocation8 + $0x2c] sm:$0xf]
    %v315 = vld [vmem:[%s8] sm:$0x1]
    %v317 = vlaneseq
    %v318 = vshrl.u32 %v317, 7
    %v319 = vsub.s32 0, %v318
    %v320 = vrot.slane %v315, %v319
    %v334 = vunpack.c.l.b16 %v303
    %v335 = vunpack.c.l.b16 %v304
    %v336 = vunpack.c.l.b16 %v305
    %v337 = vunpack.c.l.b16 %v306
    %v338 = vunpack.c.l.b16 %v307
    %v339 = vunpack.c.l.b16 %v308
    %v340 = vunpack.c.l.b16 %v309
    %v341 = vunpack.c.l.b16 %v310
    %v342 = vunpack.c.l.b16 %v311
    %v343 = vunpack.c.l.b16 %v312
    %v344 = vunpack.c.l.b16 %v313
    %v345 = vunpack.c.l.b16 %v314
    %v346 = vpack.c.b16 %v335, %v334
    %v347 = vpack.c.b16 %v337, %v336
    %v348 = vpack.c.b16 %v339, %v338
    %v349 = vpack.c.b16 %v341, %v340
    %v350 = vpack.c.b16 %v343, %v342
    %v351 = vpack.c.b16 %v345, %v344
    %v359 = vsel %vm257, %v302, 0
    %361 = vmatprep.subr.bf16.mxu0 0
    %362 = vmatpush1.bf16.msra.mxu0 %v346
    %363 = vmatprep.subr.bf16.mxu0 0
    %364 = vmatpush1.bf16.msra.mxu0 %v347
    %365 = vmatprep.subr.bf16.mxu0 0
    %366 = vmatpush1.bf16.msra.mxu0 %v348
    %367 = vmatprep.subr.bf16.mxu0 0
    %368 = vmatpush1.bf16.msra.mxu0 %v349
    %369 = vmatprep.subr.bf16.mxu0 0
    %370 = vmatpush1.bf16.msra.mxu0 %v350
    %371 = vmatprep.subr.bf16.mxu0 0
    %372 = vmatpush1.bf16.msra.mxu0 %v351
    %373 = vmatprep.subr.bf16.mxu0 0
    %374 = vmatpush1.bf16.msra.mxu0 0
    %375 = vmatprep.subr.bf16.mxu0 0
    %376 = vmatpush1.bf16.msra.mxu0 0
    %377 = vmatprep.subr.bf16.mxu0 0
    %378 = vmatpush1.bf16.msra.mxu0 0
    %379 = vmatprep.subr.bf16.mxu0 0
    %380 = vmatpush1.bf16.msra.mxu0 0
    %381 = vmatprep.subr.bf16.mxu0 0
    %382 = vmatpush1.bf16.msra.mxu0 0
    %383 = vmatprep.subr.bf16.mxu0 0
    %384 = vmatpush1.bf16.msra.mxu0 0
    %385 = vmatprep.subr.bf16.mxu0 0
    %386 = vmatpush1.bf16.msra.mxu0 0
    %387 = vmatprep.subr.bf16.mxu0 0
    %388 = vmatpush1.bf16.msra.mxu0 0
    %389 = vmatprep.subr.bf16.mxu0 0
    %390 = vmatpush1.bf16.msra.mxu0 0
    %391 = vmatprep.subr.bf16.mxu0 0
    %392 = vmatpush1.bf16.msra.mxu0 0
    %393 = vmatprep.mubr.bf16.mxu0 0
    %394 = vmatmul.mubr.bf16.gmra.mrb[0].mxu0 %v359
    %v395 = vpop.f32.mrb[0].mxu0
    %v396 = vadd.f32 %v320, %v395
    %v397 = vpop.f32.mrb[0].mxu0
    %v398 = vpop.f32.mrb[0].mxu0
    %v399 = vpop.f32.mrb[0].mxu0
    %400 = vdwg.mxu0
    %v401 = vlaneseq
    %v402 = vand.u32 %v401, 127
    %vm403 = vcmp.ge.s32.totalorder %v402, 2
    %vm404 = vcmp.lt.s32.totalorder %v402, 6
    %vm405 = vmand %vm403, %vm404
    %v406 = vmul.f32 %v396, %v396
    %v407 = vsel %vm405, %v406, 0.0
    %v408 = vsel %vm98, %v407, 0.0
    %409 = vadd.xlane.f32.xlu0 %v408
    %v410 = vpop.xlane.xlu0 %409
    %v411 = vmax.f32 %v410, 1e-24
    %v412 = vrsqrt.pop %v411
    %v413 = vmul.f32 %v396, %v412
    %v414 = vsel %vm405, %v413, %v396
    %415 = vst [vmem:[#allocation10] sm:$0x3] %v414
    // Predicated region
    $region54: #{tpu_custom_call.1} parent=1 // pred_check
      _
    $region55: #{tpu_custom_call.1} parent=1 // pred_check_branch
      %417 = sbr.rel (0) target = $region57
    $region56: #{tpu_custom_call.1} parent=1 // pred_region
      %s419 = ssub.s32 32, 32
      %420 = vsyncadd [#allocation4], %s419
      %s422 = sshll.u32 [#allocation10], 4
      %s423 = int_to_ptr.vmem [resolvable:$true] %s422
      %425 = dma.vmem_to_hbm [thread:$0]  %s423, 32, %s9, [#allocation4]
    $region57: #{tpu_custom_call.1} parent=1 // pred_fallthru
      _
    // Predicated region
    $region58: #{tpu_custom_call.1} parent=1 // pred_check
      _
    $region59: #{tpu_custom_call.1} parent=1 // pred_check_branch
      %427 = sbr.rel (0) target = $region61
    $region60: #{tpu_custom_call.1} parent=1 // pred_region
      %428 = dma.done [#allocation4], 32
    $region61: #{tpu_custom_call.1} parent=1 // pred_fallthru
      _
    %429 = vsyncpa [#allocation3], 1
    %430 = vsyncpa [#allocation6], 1
    %431 = vsyncpa [#allocation9], 1
    %432 = vsyncpa [#allocation4], 1

</llo_original>
